<compile_context>
chip_gen: v7x
topology: tpu7x:2x2x1
jax: 0.10.0
libtpu: 0.0.40
codegen_flags: <defaults>
</compile_context>

<pallas_src>
import numpy as np
import jax
import jax.numpy as jnp
from jax.experimental import pallas as pl
from jax.experimental.pallas import tpu as pltpu

B, H, W = 2, 32, 32
EPS = float(np.finfo(np.float32).eps)  # torch.finfo(torch.float32).eps


def _conv_selector(in_h, in_w, k, stride):
    """Constant one-hot selector S[k*k, in_h*in_w, out_h*out_w] such that the dense
    conv matrix is einsum('k,kio->io', w.reshape(-1), S).  Built once at import
    (pure numpy, no device data, no device_get)."""
    oh = (in_h - k) // stride + 1
    ow = (in_w - k) // stride + 1
    s = np.zeros((k * k, in_h * in_w, oh * ow), np.float32)
    for i in range(oh):
        for j in range(ow):
            for p in range(k):
                for q in range(k):
                    s[p * k + q, (i * stride + p) * in_w + (j * stride + q), i * ow + j] = 1.0
    return s


_SEL2 = _conv_selector(8, 8, k=2, stride=2)   # (4, 64, 16) constant for conv2


def face_classifier_kernel(scale_ref, xp_ref, w1_ref, m2_ref, w3_ref, o_ref):
    # scale_ref: (2,) f32 in SMEM -> [scale, 1/scale]
    # xp_ref:    (B, 64, 16) f32, clamped input as non-overlapping 4x4 patches
    # w1_ref:    (1, 1, 16)  f32, clamped conv1 weight (row-major flattened)
    # m2_ref:    (64, 16)    f32, dense matrix form of conv2 on the 8x8 map
    # w3_ref:    (1, 16)     f32, clamped conv3 weight (row-major flattened)
    scale = scale_ref[0]
    inv_scale = scale_ref[1]

    xp = xp_ref[...]
    # 4-bit symmetric fake quantize (quant_min=-15, quant_max=15, zero_point=0).
    xq = jnp.clip(jnp.round(xp * inv_scale), -15.0, 15.0) * scale

    # conv1 (k=4, s=4): per-patch dot on the VPU + lane reduce, then ReLU -> (B, 64).
    y1 = jnp.maximum(jnp.sum(xq * w1_ref[...], axis=-1), 0.0)

    # conv2 (k=2, s=2): tiny dense (B,64)@(64,16) MXU matmul, then ReLU -> (B, 16).
    y2 = jnp.maximum(
        jnp.dot(y1, m2_ref[...], preferred_element_type=jnp.float32), 0.0)

    # conv3 (k=4, s=1, full frame): VPU multiply + lane reduce -> (B, 1).
    o_ref[...] = jnp.sum(y2 * w3_ref[...], axis=-1, keepdims=True)


@jax.jit
def face_classifier_forward(x_nchw, w1, w2, w3):
    """x_nchw: (B, 1, 32, 32) f32.  w1/w3: (4,4), w2: (2,2).  Returns (B,) f32."""
    b = x_nchw.shape[0]

    # clamp input; fake-quant scale from the first-call observer (min/max of clamped x).
    xc = jnp.clip(x_nchw, -1.0, 1.0)
    min_neg = jnp.minimum(jnp.min(xc), 0.0)
    max_pos = jnp.maximum(jnp.max(xc), 0.0)
    scale = jnp.maximum(jnp.maximum(-min_neg, max_pos) / 15.0, EPS)
    scales = jnp.stack([scale, 1.0 / scale]).astype(jnp.float32)       # (2,) -> SMEM

    # conv1 is a non-overlapping 4x4 / stride-4 patch op:
    # (B,1,32,32) -> (B, 8, 4, 8, 4) -> (B, ph, pw, u, v) -> (B, 64, 16).
    xp = (xc.reshape(b, 8, 4, 8, 4)
            .transpose(0, 1, 3, 2, 4)
            .reshape(b, 64, 16))

    # forward clamps the conv weights to [-1, 1] before each conv.
    w1r = jnp.clip(w1, -1.0, 1.0).reshape(1, 1, 16)
    w2f = jnp.clip(w2, -1.0, 1.0).reshape(4)
    w3r = jnp.clip(w3, -1.0, 1.0).reshape(1, 16)
    m2 = jnp.einsum("k,kio->io", w2f, _SEL2)                           # (64, 16), jittable

    # TODO(synk): MovingAverageMinMaxObserver running-stats update across training steps
    # (averaging_constant) is stateful and not reproduced; only the first-call scale is.
    out = pl.pallas_call(
        face_classifier_kernel,
        out_shape=jax.ShapeDtypeStruct((b, 1), jnp.float32),
        in_specs=[
            pl.BlockSpec(memory_space=pltpu.MemorySpace.SMEM),   # scales (2,)
            pl.BlockSpec(memory_space=pltpu.MemorySpace.VMEM),   # xp (B,64,16)
            pl.BlockSpec(memory_space=pltpu.MemorySpace.VMEM),   # w1 (1,1,16)
            pl.BlockSpec(memory_space=pltpu.MemorySpace.VMEM),   # m2 (64,16)
            pl.BlockSpec(memory_space=pltpu.MemorySpace.VMEM),   # w3 (1,16)
        ],
        out_specs=pl.BlockSpec(memory_space=pltpu.MemorySpace.VMEM),
    )(scales, xp, w1r, m2, w3r)
    return out[:, 0]  # view(B, -1).squeeze(1)


def _reference_forward(x_nchw, w1, w2, w3):
    """Pure-JAX reference (lax conv) for correctness check."""
    xc = jnp.clip(x_nchw, -1.0, 1.0)
    min_neg = jnp.minimum(jnp.min(xc), 0.0)
    max_pos = jnp.maximum(jnp.max(xc), 0.0)
    scale = jnp.maximum(jnp.maximum(-min_neg, max_pos) / 15.0, EPS)
    inv_scale = 1.0 / scale
    xq = jnp.clip(jnp.round(xc * inv_scale), -15.0, 15.0) * scale

    def conv(v, w, stride):
        return jax.lax.conv_general_dilated(
            v, jnp.clip(w, -1.0, 1.0).reshape(1, 1, *w.shape),
            window_strides=(stride, stride), padding="VALID",
            dimension_numbers=("NCHW", "OIHW", "NCHW"))

    v = jnp.maximum(conv(xq, w1, 4), 0.0)
    v = jnp.maximum(conv(v, w2, 2), 0.0)
    v = conv(v, w3, 1)
    return v.reshape(v.shape[0], -1)[:, 0]


def _xavier_uniform(key, k):
    # nn.init.xavier_uniform_ on a (1, 1, k, k) conv weight
    fan_in = fan_out = k * k
    bound = float(np.sqrt(6.0 / (fan_in + fan_out)))
    return jax.random.uniform(key, (k, k), jnp.float32, -bound, bound)


if __name__ == "__main__":
    key = jax.random.PRNGKey(0)
    kx, k1, k2, k3 = jax.random.split(key, 4)

    x = jax.random.normal(kx, (B, 1, H, W), jnp.float32)  # values beyond [-1,1] -> clamp active
    w1 = _xavier_uniform(k1, 4)   # conv1.weight (1,1,4,4) squeezed
    w2 = _xavier_uniform(k2, 2)   # conv2.weight (1,1,2,2) squeezed
    w3 = _xavier_uniform(k3, 4)   # conv3.weight (1,1,4,4) squeezed

    out = jax.block_until_ready(face_classifier_forward(x, w1, w2, w3))
    ref = jax.block_until_ready(_reference_forward(x, w1, w2, w3))
    np.testing.assert_allclose(np.asarray(out), np.asarray(ref), rtol=1e-4, atol=1e-5)

    print("KERNEL_OK")
</pallas_src>

<mosaic_0001>
module attributes {stable_mosaic.version = 11 : i64} {
  func.func @face_classifier_kernel(%arg0: memref<2xf32, #tpu.memory_space<smem>>, %arg1: memref<2x64x16xf32, #tpu.memory_space<vmem>>, %arg2: memref<1x1x16xf32, #tpu.memory_space<vmem>>, %arg3: memref<64x16xf32, #tpu.memory_space<vmem>>, %arg4: memref<1x16xf32, #tpu.memory_space<vmem>>, %arg5: memref<2x1xf32, #tpu.memory_space<vmem>>) attributes {dimension_semantics = [], scalar_prefetch = 0 : i64, scratch_operands = 0 : i64, tpu.core_type = #tpu.core_type<tc>} {
    %c0 = arith.constant 0 : index
    %0 = memref.load %arg0[%c0] : memref<2xf32, #tpu.memory_space<smem>>
    %c1 = arith.constant 1 : index
    %1 = memref.load %arg0[%c1] : memref<2xf32, #tpu.memory_space<smem>>
    %c0_0 = arith.constant 0 : index
    %c0_1 = arith.constant 0 : index
    %c0_2 = arith.constant 0 : index
    %2 = vector.load %arg1[%c0_0, %c0_1, %c0_2] : memref<2x64x16xf32, #tpu.memory_space<vmem>>, vector<2x64x16xf32>
    %3 = vector.broadcast %1 : f32 to vector<2x64x16xf32>
    %4 = arith.mulf %2, %3 : vector<2x64x16xf32>
    %5 = math.roundeven %4 : vector<2x64x16xf32>
    %cst = arith.constant -1.500000e+01 : f32
    %cst_3 = arith.constant 1.500000e+01 : f32
    %6 = vector.broadcast %cst : f32 to vector<2x64x16xf32>
    %7 = arith.maximumf %6, %5 : vector<2x64x16xf32>
    %8 = vector.broadcast %cst_3 : f32 to vector<2x64x16xf32>
    %9 = arith.minimumf %8, %7 : vector<2x64x16xf32>
    %10 = vector.broadcast %0 : f32 to vector<2x64x16xf32>
    %11 = arith.mulf %9, %10 : vector<2x64x16xf32>
    %c0_4 = arith.constant 0 : index
    %c0_5 = arith.constant 0 : index
    %c0_6 = arith.constant 0 : index
    %12 = vector.load %arg2[%c0_4, %c0_5, %c0_6] : memref<1x1x16xf32, #tpu.memory_space<vmem>>, vector<1x1x16xf32>
    %13 = vector.broadcast %12 : vector<1x1x16xf32> to vector<2x64x16xf32>
    %14 = arith.mulf %11, %13 : vector<2x64x16xf32>
    %cst_7 = arith.constant dense<0.000000e+00> : vector<2x64xf32>
    %15 = vector.multi_reduction <add>, %14, %cst_7 [2] : vector<2x64x16xf32> to vector<2x64xf32>
    %cst_8 = arith.constant 0.000000e+00 : f32
    %16 = vector.broadcast %cst_8 : f32 to vector<2x64xf32>
    %17 = arith.maximumf %15, %16 : vector<2x64xf32>
    %c0_9 = arith.constant 0 : index
    %c0_10 = arith.constant 0 : index
    %18 = vector.load %arg3[%c0_9, %c0_10] : memref<64x16xf32, #tpu.memory_space<vmem>>, vector<64x16xf32>
    %cst_11 = arith.constant dense<0.000000e+00> : vector<2x16xf32>
    %19 = tpu.matmul %17, %18, %cst_11 {dimension_numbers = #tpu.dot_dimension_numbers<[1], [0], [0], [1], [0, 0, 1, 1], [], []>} : vector<2x64xf32>, vector<64x16xf32>, vector<2x16xf32> -> vector<2x16xf32>
    %cst_12 = arith.constant 0.000000e+00 : f32
    %20 = vector.broadcast %cst_12 : f32 to vector<2x16xf32>
    %21 = arith.maximumf %19, %20 : vector<2x16xf32>
    %c0_13 = arith.constant 0 : index
    %c0_14 = arith.constant 0 : index
    %22 = vector.load %arg4[%c0_13, %c0_14] : memref<1x16xf32, #tpu.memory_space<vmem>>, vector<1x16xf32>
    %23 = vector.broadcast %22 : vector<1x16xf32> to vector<2x16xf32>
    %24 = arith.mulf %21, %23 : vector<2x16xf32>
    %cst_15 = arith.constant dense<0.000000e+00> : vector<2xf32>
    %25 = vector.multi_reduction <add>, %24, %cst_15 [1] : vector<2x16xf32> to vector<2xf32>
    %26 = vector.shape_cast %25 : vector<2xf32> to vector<2x1xf32>
    %c0_16 = arith.constant 0 : index
    %c0_17 = arith.constant 0 : index
    %27 = vector.load %arg5[%c0_16, %c0_17] : memref<2x1xf32, #tpu.memory_space<vmem>>, vector<2x1xf32>
    tpu.vector_store %arg5[%c0_16, %c0_17], %26 {strides = array<i32>} : memref<2x1xf32, #tpu.memory_space<vmem>>, vector<2x1xf32>,
    return
  }
}

</mosaic_0001>

<llo_original>
// kernel: face_classifier_forward.1
$region0: #{face_classifier_forward.1}
  #allocation0 [shape = 'u32[]', space=smem, size = 0x4, offset = 0x4, fixed_abs, tag = 'smem constant byte address 0x4 - core index']
  #allocation1 [shape = 'u32[144,128]{1,0:T(1,128)}', space=vmem, size = 0x12000, scoped, tag = 'internal scratch']
  %s0 = inlined_call_operand.vmem [shape: f32[2], index: 0, kind: input, shape index: {}]
  %s1 = inlined_call_operand.vmem [shape: f32[2,64,16], index: 1, kind: input, shape index: {}]
  %s2 = inlined_call_operand.vmem [shape: f32[1,1,16], index: 2, kind: input, shape index: {}]
  %s3 = inlined_call_operand.vmem [shape: f32[64,16], index: 3, kind: input, shape index: {}]
  %s4 = inlined_call_operand.vmem [shape: f32[1,16], index: 4, kind: input, shape index: {}]
  %s5 = inlined_call_operand.vmem [shape: f32[2,1], index: 5, kind: output, shape index: {}]
  %s6 = sld [smem:[#allocation0]]
  $region34: #{face_classifier_forward.1} parent=0
    _
  %s8 = ssub.s32 1, %s6
  %s9 = scalar_select 0, %s8, %s6
  $region1: #{face_classifier_forward.1} parent=0
    #allocation2 [shape = 'u8[512]{0}', space=smem, size = 0x200, scoped, tag = 'input window, operand 0, single buffered']
    #allocation3 [shape = 's32[1]{0}', space=sflag, size = 0x4, scoped, tag = 'scoped memory for face_classifier_forward.1']
    %10 = vsyncpa [#allocation3], 0
    // Predicated region
    $region2: #{face_classifier_forward.1} parent=1 // pred_check
      _
    $region3: #{face_classifier_forward.1} parent=1 // pred_check_branch
      %12 = sbr.rel (0) target = $region5
    $region4: #{face_classifier_forward.1} parent=1 // pred_region
      %s14 = ssub.s32 16, 16
      %15 = vsyncadd [#allocation3], %s14
      %s17 = sshll.u32 %s0, 4
      %s18 = int_to_ptr.vmem [resolvable:$true] %s17
      %20 = dma.vmem_to_smem %s18, 16, [#allocation2], [#allocation3]
    $region5: #{face_classifier_forward.1} parent=1 // pred_fallthru
      _
    // Predicated region
    $region6: #{face_classifier_forward.1} parent=1 // pred_check
      _
    $region7: #{face_classifier_forward.1} parent=1 // pred_check_branch
      %22 = sbr.rel (0) target = $region9
    $region8: #{face_classifier_forward.1} parent=1 // pred_region
      _
    $region9: #{face_classifier_forward.1} parent=1 // pred_fallthru
      _
    // Predicated region
    $region10: #{face_classifier_forward.1} parent=1 // pred_check
      _
    $region11: #{face_classifier_forward.1} parent=1 // pred_check_branch
      %24 = sbr.rel (0) target = $region13
    $region12: #{face_classifier_forward.1} parent=1 // pred_region
      _
    $region13: #{face_classifier_forward.1} parent=1 // pred_fallthru
      _
    // Predicated region
    $region14: #{face_classifier_forward.1} parent=1 // pred_check
      _
    $region15: #{face_classifier_forward.1} parent=1 // pred_check_branch
      %26 = sbr.rel (0) target = $region17
    $region16: #{face_classifier_forward.1} parent=1 // pred_region
      _
    $region17: #{face_classifier_forward.1} parent=1 // pred_fallthru
      _
    // Predicated region
    $region18: #{face_classifier_forward.1} parent=1 // pred_check
      _
    $region19: #{face_classifier_forward.1} parent=1 // pred_check_branch
      %28 = sbr.rel (0) target = $region21
    $region20: #{face_classifier_forward.1} parent=1 // pred_region
      _
    $region21: #{face_classifier_forward.1} parent=1 // pred_fallthru
      _
    // Predicated region
    $region22: #{face_classifier_forward.1} parent=1 // pred_check
      _
    $region23: #{face_classifier_forward.1} parent=1 // pred_check_branch
      %30 = sbr.rel (0) target = $region25
    $region24: #{face_classifier_forward.1} parent=1 // pred_region
      %31 = dma.done [#allocation3], 16
    $region25: #{face_classifier_forward.1} parent=1 // pred_fallthru
      _
    %32 = sfence
    %s33 = sld [smem:[#allocation2]]
    %s34 = sld [smem:[#allocation2 + $0x1]]
    %v35 = vld [vmem:[%s1] sm:$0xff]
    %v36 = vld [vmem:[%s1 + $0x8] sm:$0xff]
    %v37 = vld [vmem:[%s1 + $0x10] sm:$0xff]
    %v38 = vld [vmem:[%s1 + $0x18] sm:$0xff]
    %v39 = vld [vmem:[%s1 + $0x20] sm:$0xff]
    %v40 = vld [vmem:[%s1 + $0x28] sm:$0xff]
    %v41 = vld [vmem:[%s1 + $0x30] sm:$0xff]
    %v42 = vld [vmem:[%s1 + $0x38] sm:$0xff]
    %v43 = vld [vmem:[%s1 + $0x40] sm:$0xff]
    %v44 = vld [vmem:[%s1 + $0x48] sm:$0xff]
    %v45 = vld [vmem:[%s1 + $0x50] sm:$0xff]
    %v46 = vld [vmem:[%s1 + $0x58] sm:$0xff]
    %v47 = vld [vmem:[%s1 + $0x60] sm:$0xff]
    %v48 = vld [vmem:[%s1 + $0x68] sm:$0xff]
    %v49 = vld [vmem:[%s1 + $0x70] sm:$0xff]
    %v50 = vld [vmem:[%s1 + $0x78] sm:$0xff]
    %v51 = vstv %s34
    %v52 = vmul.f32 %v35, %v51
    %v53 = vmul.f32 %v36, %v51
    %v54 = vmul.f32 %v37, %v51
    %v55 = vmul.f32 %v38, %v51
    %v56 = vmul.f32 %v39, %v51
    %v57 = vmul.f32 %v40, %v51
    %v58 = vmul.f32 %v41, %v51
    %v59 = vmul.f32 %v42, %v51
    %v60 = vmul.f32 %v43, %v51
    %v61 = vmul.f32 %v44, %v51
    %v62 = vmul.f32 %v45, %v51
    %v63 = vmul.f32 %v46, %v51
    %v64 = vmul.f32 %v47, %v51
    %v65 = vmul.f32 %v48, %v51
    %v66 = vmul.f32 %v49, %v51
    %v67 = vmul.f32 %v50, %v51
    %v68 = vround.ne.pseudo %v52
    %v69 = vround.ne.pseudo %v53
    %v70 = vround.ne.pseudo %v54
    %v71 = vround.ne.pseudo %v55
    %v72 = vround.ne.pseudo %v56
    %v73 = vround.ne.pseudo %v57
    %v74 = vround.ne.pseudo %v58
    %v75 = vround.ne.pseudo %v59
    %v76 = vround.ne.pseudo %v60
    %v77 = vround.ne.pseudo %v61
    %v78 = vround.ne.pseudo %v62
    %v79 = vround.ne.pseudo %v63
    %v80 = vround.ne.pseudo %v64
    %v81 = vround.ne.pseudo %v65
    %v82 = vround.ne.pseudo %v66
    %v83 = vround.ne.pseudo %v67
    %v84 = vmax.f32 %v68, -15.0
    %v85 = vmax.f32 %v69, -15.0
    %v86 = vmax.f32 %v70, -15.0
    %v87 = vmax.f32 %v71, -15.0
    %v88 = vmax.f32 %v72, -15.0
    %v89 = vmax.f32 %v73, -15.0
    %v90 = vmax.f32 %v74, -15.0
    %v91 = vmax.f32 %v75, -15.0
    %v92 = vmax.f32 %v76, -15.0
    %v93 = vmax.f32 %v77, -15.0
    %v94 = vmax.f32 %v78, -15.0
    %v95 = vmax.f32 %v79, -15.0
    %v96 = vmax.f32 %v80, -15.0
    %v97 = vmax.f32 %v81, -15.0
    %v98 = vmax.f32 %v82, -15.0
    %v99 = vmax.f32 %v83, -15.0
    %v100 = vmin.f32 %v84, 15.0
    %v101 = vmin.f32 %v85, 15.0
    %v102 = vmin.f32 %v86, 15.0
    %v103 = vmin.f32 %v87, 15.0
    %v104 = vmin.f32 %v88, 15.0
    %v105 = vmin.f32 %v89, 15.0
    %v106 = vmin.f32 %v90, 15.0
    %v107 = vmin.f32 %v91, 15.0
    %v108 = vmin.f32 %v92, 15.0
    %v109 = vmin.f32 %v93, 15.0
    %v110 = vmin.f32 %v94, 15.0
    %v111 = vmin.f32 %v95, 15.0
    %v112 = vmin.f32 %v96, 15.0
    %v113 = vmin.f32 %v97, 15.0
    %v114 = vmin.f32 %v98, 15.0
    %v115 = vmin.f32 %v99, 15.0
    %v116 = vstv %s33
    %v117 = vmul.f32 %v100, %v116
    %v118 = vmul.f32 %v101, %v116
    %v119 = vmul.f32 %v102, %v116
    %v120 = vmul.f32 %v103, %v116
    %v121 = vmul.f32 %v104, %v116
    %v122 = vmul.f32 %v105, %v116
    %v123 = vmul.f32 %v106, %v116
    %v124 = vmul.f32 %v107, %v116
    %v125 = vmul.f32 %v108, %v116
    %v126 = vmul.f32 %v109, %v116
    %v127 = vmul.f32 %v110, %v116
    %v128 = vmul.f32 %v111, %v116
    %v129 = vmul.f32 %v112, %v116
    %v130 = vmul.f32 %v113, %v116
    %v131 = vmul.f32 %v114, %v116
    %v132 = vmul.f32 %v115, %v116
    %v133 = vld [vmem:[%s2] sm:$0x1]
    %v135 = vlaneseq
    %v136 = vshrl.u32 %v135, 7
    %v137 = vsub.s32 0, %v136
    %v138 = vrot.slane %v133, %v137
    %v140 = vmul.f32 %v117, %v138
    %v141 = vmul.f32 %v118, %v138
    %v142 = vmul.f32 %v119, %v138
    %v143 = vmul.f32 %v120, %v138
    %v144 = vmul.f32 %v121, %v138
    %v145 = vmul.f32 %v122, %v138
    %v146 = vmul.f32 %v123, %v138
    %v147 = vmul.f32 %v124, %v138
    %v148 = vmul.f32 %v125, %v138
    %v149 = vmul.f32 %v126, %v138
    %v150 = vmul.f32 %v127, %v138
    %v151 = vmul.f32 %v128, %v138
    %v152 = vmul.f32 %v129, %v138
    %v153 = vmul.f32 %v130, %v138
    %v154 = vmul.f32 %v131, %v138
    %v155 = vmul.f32 %v132, %v138
    %vm156 = vcmask 130048
    %v157 = vsel %vm156, %v140, 0.0
    %158 = vadd.xlane.f32.xlu0 %v157
    %v159 = vpop.xlane.xlu0 %158
    %v160 = vsel %vm156, %v141, 0.0
    %161 = vadd.xlane.f32.xlu0 %v160
    %v162 = vpop.xlane.xlu0 %161
    %v163 = vsel %vm156, %v142, 0.0
    %164 = vadd.xlane.f32.xlu0 %v163
    %v165 = vpop.xlane.xlu0 %164
    %v166 = vsel %vm156, %v143, 0.0
    %167 = vadd.xlane.f32.xlu0 %v166
    %v168 = vpop.xlane.xlu0 %167
    %v169 = vsel %vm156, %v144, 0.0
    %170 = vadd.xlane.f32.xlu0 %v169
    %v171 = vpop.xlane.xlu0 %170
    %v172 = vsel %vm156, %v145, 0.0
    %173 = vadd.xlane.f32.xlu0 %v172
    %v174 = vpop.xlane.xlu0 %173
    %v175 = vsel %vm156, %v146, 0.0
    %176 = vadd.xlane.f32.xlu0 %v175
    %v177 = vpop.xlane.xlu0 %176
    %v178 = vsel %vm156, %v147, 0.0
    %179 = vadd.xlane.f32.xlu0 %v178
    %v180 = vpop.xlane.xlu0 %179
    %v181 = vsel %vm156, %v148, 0.0
    %182 = vadd.xlane.f32.xlu0 %v181
    %v183 = vpop.xlane.xlu0 %182
    %v184 = vsel %vm156, %v149, 0.0
    %185 = vadd.xlane.f32.xlu0 %v184
    %v186 = vpop.xlane.xlu0 %185
    %v187 = vsel %vm156, %v150, 0.0
    %188 = vadd.xlane.f32.xlu0 %v187
    %v189 = vpop.xlane.xlu0 %188
    %v190 = vsel %vm156, %v151, 0.0
    %191 = vadd.xlane.f32.xlu0 %v190
    %v192 = vpop.xlane.xlu0 %191
    %v193 = vsel %vm156, %v152, 0.0
    %194 = vadd.xlane.f32.xlu0 %v193
    %v195 = vpop.xlane.xlu0 %194
    %v196 = vsel %vm156, %v153, 0.0
    %197 = vadd.xlane.f32.xlu0 %v196
    %v198 = vpop.xlane.xlu0 %197
    %v199 = vsel %vm156, %v154, 0.0
    %200 = vadd.xlane.f32.xlu0 %v199
    %v201 = vpop.xlane.xlu0 %200
    %v202 = vsel %vm156, %v155, 0.0
    %203 = vadd.xlane.f32.xlu0 %v202
    %v204 = vpop.xlane.xlu0 %203
    %v205 = vmax.f32 %v159, 0.0
    %v206 = vmax.f32 %v162, 0.0
    %v207 = vmax.f32 %v165, 0.0
    %v208 = vmax.f32 %v168, 0.0
    %v209 = vmax.f32 %v171, 0.0
    %v210 = vmax.f32 %v174, 0.0
    %v211 = vmax.f32 %v177, 0.0
    %v212 = vmax.f32 %v180, 0.0
    %v213 = vmax.f32 %v183, 0.0
    %v214 = vmax.f32 %v186, 0.0
    %v215 = vmax.f32 %v189, 0.0
    %v216 = vmax.f32 %v192, 0.0
    %v217 = vmax.f32 %v195, 0.0
    %v218 = vmax.f32 %v198, 0.0
    %v219 = vmax.f32 %v201, 0.0
    %v220 = vmax.f32 %v204, 0.0
    %v221 = vld [vmem:[%s3] sm:$0xff]
    %v222 = vld [vmem:[%s3 + $0x8] sm:$0xff]
    %v223 = vld [vmem:[%s3 + $0x10] sm:$0xff]
    %v224 = vld [vmem:[%s3 + $0x18] sm:$0xff]
    %v225 = vld [vmem:[%s3 + $0x20] sm:$0xff]
    %v226 = vld [vmem:[%s3 + $0x28] sm:$0xff]
    %v227 = vld [vmem:[%s3 + $0x30] sm:$0xff]
    %v228 = vld [vmem:[%s3 + $0x38] sm:$0xff]
    %v245 = vlaneseq
    %v246 = vand.u32 %v245, 127
    %v247 = vlaneseq
    %v248 = vshrl.u32 %v247, 7
    %v249 = vsub.s32 %v246, %v248
    %v250 = vrot.slane %v205, %v249
    %v251 = vadd.s32 %v246, 4294967288
    %v252 = vlaneseq
    %v253 = vshrl.u32 %v252, 7
    %v254 = vsub.s32 %v251, %v253
    %v255 = vrot.slane %v206, %v254
    %vm256 = vcmask 130112
    %v257 = vsel %vm256, %v255, %v250
    %v258 = vadd.s32 %v246, 4294967280
    %v259 = vlaneseq
    %v260 = vshrl.u32 %v259, 7
    %v261 = vsub.s32 %v258, %v260
    %v262 = vrot.slane %v207, %v261
    %vm263 = vcmask 195712
    %v264 = vsel %vm263, %v262, %v257
    %v265 = vadd.s32 %v246, 4294967272
    %v266 = vlaneseq
    %v267 = vshrl.u32 %v266, 7
    %v268 = vsub.s32 %v265, %v267
    %v269 = vrot.slane %v208, %v268
    %vm270 = vcmask 261312
    %v271 = vsel %vm270, %v269, %v264
    %v272 = vadd.s32 %v246, 4294967264
    %v273 = vlaneseq
    %v274 = vshrl.u32 %v273, 7
    %v275 = vsub.s32 %v272, %v274
    %v276 = vrot.slane %v209, %v275
    %vm277 = vcmask 326912
    %v278 = vsel %vm277, %v276, %v271
    %v279 = vadd.s32 %v246, 4294967256
    %v280 = vlaneseq
    %v281 = vshrl.u32 %v280, 7
    %v282 = vsub.s32 %v279, %v281
    %v283 = vrot.slane %v210, %v282
    %vm284 = vcmask 392512
    %v285 = vsel %vm284, %v283, %v278
    %v286 = vadd.s32 %v246, 4294967248
    %v287 = vlaneseq
    %v288 = vshrl.u32 %v287, 7
    %v289 = vsub.s32 %v286, %v288
    %v290 = vrot.slane %v211, %v289
    %vm291 = vcmask 458112
    %v292 = vsel %vm291, %v290, %v285
    %v293 = vadd.s32 %v246, 4294967240
    %v294 = vlaneseq
    %v295 = vshrl.u32 %v294, 7
    %v296 = vsub.s32 %v293, %v295
    %v297 = vrot.slane %v212, %v296
    %vm298 = vcmask 523712
    %v299 = vsel %vm298, %v297, %v292
    %v300 = vlaneseq
    %v301 = vshrl.u32 %v300, 7
    %v302 = vsub.s32 %v246, %v301
    %v303 = vrot.slane %v213, %v302
    %v304 = vlaneseq
    %v305 = vshrl.u32 %v304, 7
    %v306 = vsub.s32 %v251, %v305
    %v307 = vrot.slane %v214, %v306
    %v308 = vsel %vm256, %v307, %v303
    %v309 = vlaneseq
    %v310 = vshrl.u32 %v309, 7
    %v311 = vsub.s32 %v258, %v310
    %v312 = vrot.slane %v215, %v311
    %v313 = vsel %vm263, %v312, %v308
    %v314 = vlaneseq
    %v315 = vshrl.u32 %v314, 7
    %v316 = vsub.s32 %v265, %v315
    %v317 = vrot.slane %v216, %v316
    %v318 = vsel %vm270, %v317, %v313
    %v319 = vlaneseq
    %v320 = vshrl.u32 %v319, 7
    %v321 = vsub.s32 %v272, %v320
    %v322 = vrot.slane %v217, %v321
    %v323 = vsel %vm277, %v322, %v318
    %v324 = vlaneseq
    %v325 = vshrl.u32 %v324, 7
    %v326 = vsub.s32 %v279, %v325
    %v327 = vrot.slane %v218, %v326
    %v328 = vsel %vm284, %v327, %v323
    %v329 = vlaneseq
    %v330 = vshrl.u32 %v329, 7
    %v331 = vsub.s32 %v286, %v330
    %v332 = vrot.slane %v219, %v331
    %v333 = vsel %vm291, %v332, %v328
    %v334 = vlaneseq
    %v335 = vshrl.u32 %v334, 7
    %v336 = vsub.s32 %v293, %v335
    %v337 = vrot.slane %v220, %v336
    %v338 = vsel %vm298, %v337, %v333
    %vm339 = vcmask 1041409
    %v340 = vsel %vm339, %v338, %v299
    %vm341 = vcmask 523264
    %v342 = vsel %vm341, %v340, 0
    %344 = vmatprep.subr.mxu0 0.0
    %345 = vmatpush1.msra.mxu0 %v221
    %346 = vmatprep.subr.mxu0 0.0
    %347 = vmatpush1.msra.mxu0 %v222
    %348 = vmatprep.subr.mxu0 0.0
    %349 = vmatpush1.msra.mxu0 %v223
    %350 = vmatprep.subr.mxu0 0.0
    %351 = vmatpush1.msra.mxu0 %v224
    %352 = vmatprep.subr.mxu0 0.0
    %353 = vmatpush1.msra.mxu0 %v225
    %354 = vmatprep.subr.mxu0 0.0
    %355 = vmatpush1.msra.mxu0 %v226
    %356 = vmatprep.subr.mxu0 0.0
    %357 = vmatpush1.msra.mxu0 %v227
    %358 = vmatprep.subr.mxu0 0.0
    %359 = vmatpush1.msra.mxu0 %v228
    %360 = vmatprep.subr.mxu0 0.0
    %361 = vmatpush1.msra.mxu0 0.0
    %362 = vmatprep.subr.mxu0 0.0
    %363 = vmatpush1.msra.mxu0 0.0
    %364 = vmatprep.subr.mxu0 0.0
    %365 = vmatpush1.msra.mxu0 0.0
    %366 = vmatprep.subr.mxu0 0.0
    %367 = vmatpush1.msra.mxu0 0.0
    %368 = vmatprep.subr.mxu0 0.0
    %369 = vmatpush1.msra.mxu0 0.0
    %370 = vmatprep.subr.mxu0 0.0
    %371 = vmatpush1.msra.mxu0 0.0
    %372 = vmatprep.subr.mxu0 0.0
    %373 = vmatpush1.msra.mxu0 0.0
    %374 = vmatprep.subr.mxu0 0.0
    %375 = vmatpush1.msra.mxu0 0.0
    %376 = vmatprep.subr.mxu0 0.0
    %377 = vmatpush1.msra.mxu0 0.0
    %378 = vmatprep.subr.mxu0 0.0
    %379 = vmatpush1.msra.mxu0 0.0
    %380 = vmatprep.subr.mxu0 0.0
    %381 = vmatpush1.msra.mxu0 0.0
    %382 = vmatprep.subr.mxu0 0.0
    %383 = vmatpush1.msra.mxu0 0.0
    %384 = vmatprep.subr.mxu0 0.0
    %385 = vmatpush1.msra.mxu0 0.0
    %386 = vmatprep.subr.mxu0 0.0
    %387 = vmatpush1.msra.mxu0 0.0
    %388 = vmatprep.subr.mxu0 0.0
    %389 = vmatpush1.msra.mxu0 0.0
    %390 = vmatprep.subr.mxu0 0.0
    %391 = vmatpush1.msra.mxu0 0.0
    %392 = vmatprep.subr.mxu0 0.0
    %393 = vmatpush1.msra.mxu0 0.0
    %394 = vmatprep.subr.mxu0 0.0
    %395 = vmatpush1.msra.mxu0 0.0
    %396 = vmatprep.subr.mxu0 0.0
    %397 = vmatpush1.msra.mxu0 0.0
    %398 = vmatprep.subr.mxu0 0.0
    %399 = vmatpush1.msra.mxu0 0.0
    %400 = vmatprep.subr.mxu0 0.0
    %401 = vmatpush1.msra.mxu0 0.0
    %402 = vmatprep.subr.mxu0 0.0
    %403 = vmatpush1.msra.mxu0 0.0
    %404 = vmatprep.subr.mxu0 0.0
    %405 = vmatpush1.msra.mxu0 0.0
    %406 = vmatprep.subr.mxu0 0.0
    %407 = vmatpush1.msra.mxu0 0.0
    %408 = vmatprep.mubr.f32.mxu0 0.0
    %409 = vmatmul.mubr.f32.gmra.mrb[0].mxu0 %v342
    %v410 = vpop.f32.mrb[0].mxu0
    %v411 = vadd.f32 0.0, %v410
    %v412 = vpop.f32.mrb[0].mxu0
    %413 = vdwg.mxu0
    %v414 = vmax.f32 %v411, 0.0
    %v415 = vld [vmem:[%s4] sm:$0x1]
    %v417 = vlaneseq
    %v418 = vshrl.u32 %v417, 7
    %v419 = vsub.s32 0, %v418
    %v420 = vrot.slane %v415, %v419
    %v422 = vmul.f32 %v414, %v420
    %vm423 = vcmask 123904
    %v424 = vsel %vm423, %v422, 0.0
    %425 = vadd.xlane.f32.xlu0 %v424
    %v426 = vpop.xlane.xlu0 %425
    %vm427 = vcmask 1024
    %428 = vst.msk [vmem:[%s5] sm:$0x3] %vm427, %v426
    // Predicated region
    $region26: #{face_classifier_forward.1} parent=1 // pred_check
      _
    $region27: #{face_classifier_forward.1} parent=1 // pred_check_branch
      %430 = sbr.rel (0) target = $region29
    $region28: #{face_classifier_forward.1} parent=1 // pred_region
      _
    $region29: #{face_classifier_forward.1} parent=1 // pred_fallthru
      _
    // Predicated region
    $region30: #{face_classifier_forward.1} parent=1 // pred_check
      _
    $region31: #{face_classifier_forward.1} parent=1 // pred_check_branch
      %432 = sbr.rel (0) target = $region33
    $region32: #{face_classifier_forward.1} parent=1 // pred_region
      _
    $region33: #{face_classifier_forward.1} parent=1 // pred_fallthru
      _
    %433 = vsyncpa [#allocation3], 1

</llo_original>
